<compile_context>
chip_gen: v6e
topology: v6e:2x2x1
jax: 0.10.0
libtpu: 0.0.40
codegen_flags: <defaults>
</compile_context>

<pallas_src>
import math

import jax
import jax.numpy as jnp
import numpy as np
from jax.experimental import pallas as pl
from jax.experimental.pallas import tpu as pltpu

LANE = 128          # all layer output dims are padded to multiples of this
TN_CHUNK = 256      # per-layer output-column chunk (bounds the live f32 accumulator)
MIB = 1024 * 1024


def _round_up(v, m):
    return ((v + m - 1) // m) * m


# Activations applied in f32 on the VPU/EUP.  Padded weight rows of the *next*
# layer are zero, so act(0) != 0 on padded columns is still mathematically inert.
_ACT = {
    "relu": lambda v: jnp.maximum(v, 0.0),
    "gelu": jax.nn.gelu,
    "elu": jax.nn.elu,
    "selu": jax.nn.selu,
    "celu": jax.nn.celu,
    "leaky_relu": jax.nn.leaky_relu,
    "silu": jax.nn.silu,
    "sigmoid": jax.nn.sigmoid,
}
# TODO(synk): 'prelu' has a learnable slope parameter and is not wired into the fused kernel.


def _make_mlp_kernel(num_layers, n_pads, matmul_dtype, act="relu", tn=TN_CHUNK):
    """Whole MLP for one M-tile; intermediates live in small VMEM scratch."""
    act_fn = _ACT[act]

    def kernel(x_ref, *refs):
        wb = refs[: 2 * num_layers]                 # (w0, b0, w1, b1, ...)
        o_ref = refs[2 * num_layers]
        scr = refs[2 * num_layers + 1:]             # () or (scr_a, scr_b)

        # Cast the X tile once on the VPU (no-op if the wrapper already made bf16).
        h = x_ref[...].astype(matmul_dtype)

        for li in range(num_layers):
            w_ref = wb[2 * li]
            b_ref = wb[2 * li + 1]
            n_pad = n_pads[li]
            last = li == num_layers - 1
            dst = o_ref if last else scr[li % 2]

            # Static column-chunk loop: keeps the live f32 accumulator at
            # (tm, tn) so wide hidden layers stay MXU-bound instead of
            # spilling through the vld/vst slots.  Chunk starts/widths are
            # static multiples of 128 -> every store is an unmasked vst.
            for col in range(0, n_pad, tn):
                w = min(tn, n_pad - col)
                acc = jnp.dot(h, w_ref[:, col:col + w],
                              preferred_element_type=jnp.float32)
                acc = acc + b_ref[:, col:col + w]        # (1, w) broadcasts over rows
                if last:
                    dst[:, col:col + w] = acc.astype(dst.dtype)
                else:
                    dst[:, col:col + w] = act_fn(acc).astype(matmul_dtype)

            if not last:
                h = dst[:, :n_pad]   # next layer's MXU operand (bf16, from VMEM scratch)
        # NOTE: when the grid over-covers M, padded rows pick up the bias and
        # propagate nonzero values through the layers; the wrapper slices them
        # off — do not reuse the padded output slab without that slice.

    return kernel


def prepare_mlp_params(params, *, matmul_dtype=jnp.bfloat16):
    """Pad + cast every (W, b) ONCE (hoisted out of the per-call path).

    Each layer's output dim (and the next layer's input dim) is zero-padded to a
    multiple of 128 -> lane-dense intermediates and output stores; zero padding
    contributes nothing through matmul + activation.
    """
    num_in = params[0][0].shape[0]
    num_out = params[-1][0].shape[1]
    wb_flat, n_pads = [], []
    k_pad = num_in                              # first-layer K kept at num_in (no extra X pass)
    for (w, b) in params:
        k, n = w.shape
        n_pad = _round_up(n, LANE)
        w_p = jnp.zeros((k_pad, n_pad), matmul_dtype).at[:k, :n].set(w.astype(matmul_dtype))
        b_p = jnp.zeros((1, n_pad), jnp.float32).at[:, :n].set(
            b.reshape(1, -1).astype(jnp.float32))
        wb_flat += [w_p, b_p]
        n_pads.append(n_pad)
        k_pad = n_pad
    return {
        "wb": tuple(wb_flat),
        "n_pads": tuple(n_pads),
        "num_in": num_in,
        "num_out": num_out,
        "num_layers": len(params),
        "matmul_dtype": matmul_dtype,
    }


def _physical_vmem_bytes():
    try:
        info = pltpu.get_tpu_info()
        for name in ("vmem_capacity_bytes", "vmem_bytes", "vmem_size_bytes"):
            v = getattr(info, name, None)
            if v:
                return int(v)
    except Exception:
        pass
    return 64 * MIB   # conservative default (v7x has the smallest VMEM)


def _vmem_tile_bytes(tm, k_in, x_itemsize, n_pads, scr_w, out_itemsize):
    """(resident weight/bias bytes, per-step tile + scratch bytes)."""
    w_bytes = 0
    k = k_in
    for n in n_pads:
        w_bytes += k * n * 2          # bf16 weight (single-buffered)
        w_bytes += 8 * n * 4          # f32 bias row, sublane-padded to 8
        k = n
    io = 2 * tm * k_in * x_itemsize               # double-buffered X tile
    io += 2 * tm * n_pads[-1] * out_itemsize      # double-buffered output tile
    io += (2 * tm * scr_w * 2) if scr_w else 0    # ping-pong intermediate scratch (bf16)
    return w_bytes, io


def mlp_forward(x, params, *, tm=512, act="relu", out_dtype=None):
    """act(W_in x) -> act(W_inter x)* -> W_out x, fused into one pallas_call."""
    prep = params if isinstance(params, dict) else prepare_mlp_params(params)
    wb_flat = prep["wb"]
    n_pads = prep["n_pads"]
    num_in, num_out = prep["num_in"], prep["num_out"]
    num_layers = prep["num_layers"]
    matmul_dtype = prep["matmul_dtype"]

    out_dtype = x.dtype if out_dtype is None else out_dtype
    lead = x.shape[:-1]
    x2d = x.reshape(-1, num_in)
    M = x2d.shape[0]
    n_out_pad = n_pads[-1]
    scr_w = max(n_pads[:-1]) if num_layers > 1 else 0

    # --- row-tile selection ------------------------------------------------
    tm_eff = tm if M >= tm else _round_up(max(M, 16), 16)   # 16: bf16 sublane pack
    # v7x has 2 TensorCores and "parallel" shards grid steps across them:
    # make sure the grid has >= 2 steps when the problem is big enough.
    if _round_up(M, tm_eff) // tm_eff < 2 and tm_eff >= 32:
        half = _round_up(tm_eff // 2, 16)
        if _round_up(M, half) // half >= 2:
            tm_eff = half

    # --- generation-aware VMEM budget ---------------------------------------
    phys = _physical_vmem_bytes()
    cap = max(32 * MIB, min(phys - 16 * MIB, int(0.8 * phys)))  # ~48 MiB v7x, ~100 MiB v5e/v6e

    def _needed(tm_):
        pad_ = _round_up(M, tm_) != M
        x_isz = 2 if pad_ else np.dtype(x2d.dtype).itemsize
        w_b, io_b = _vmem_tile_bytes(tm_, num_in, x_isz, n_pads, scr_w,
                                     np.dtype(out_dtype).itemsize)
        # 2*w_b also covers the double-buffered-weights fallback path, + margin.
        return 2 * w_b + io_b + 4 * MIB

    while _needed(tm_eff) > cap and tm_eff > 32:
        tm_eff = max(16, _round_up(tm_eff // 2, 16))
    if _needed(tm_eff) > cap:
        # TODO(synk): K/N-tiled fallback (stream weight tiles per grid step) for
        # hidden dims too large to keep fully resident in VMEM.
        raise ValueError("MLP weights too large to keep resident in VMEM for this generation")
    vmem_limit = int(min(cap, max(32 * MIB, _needed(tm_eff))))

    M_pad = _round_up(M, tm_eff)
    grid = (M_pad // tm_eff,)

    # --- X: skip the pad+cast HBM pass when M is already tile-aligned --------
    if M_pad == M:
        x_in = x2d                                   # in-kernel bf16 cast (VPU has slack)
    else:
        x_in = jnp.zeros((M_pad, num_in), matmul_dtype).at[:M, :].set(
            x2d.astype(matmul_dtype))

    kernel = _make_mlp_kernel(num_layers, n_pads, matmul_dtype, act=act)

    def _build(single_buffer_weights):
        # Constant-index weights never get re-fetched; single-buffer them to
        # halve their VMEM footprint (key lever on v7x's 64 MiB VMEM).
        wb_kw = dict(pipeline_mode=pl.Buffered(1)) if single_buffer_weights else {}
        in_specs = [pl.BlockSpec((tm_eff, num_in), lambda i: (i, 0))]   # row tile of X
        for li in range(num_layers):
            in_specs.append(pl.BlockSpec(wb_flat[2 * li].shape, lambda i: (0, 0), **wb_kw))
            in_specs.append(pl.BlockSpec(wb_flat[2 * li + 1].shape, lambda i: (0, 0), **wb_kw))
        scratch = (
            [pltpu.VMEM((tm_eff, scr_w), matmul_dtype),
             pltpu.VMEM((tm_eff, scr_w), matmul_dtype)]
            if scr_w else []
        )
        return pl.pallas_call(
            kernel,
            out_shape=jax.ShapeDtypeStruct((M_pad, n_out_pad), out_dtype),
            grid_spec=pltpu.PrefetchScalarGridSpec(
                num_scalar_prefetch=0,
                grid=grid,
                in_specs=in_specs,
                out_specs=pl.BlockSpec((tm_eff, n_out_pad), lambda i: (i, 0)),
                scratch_shapes=scratch,
            ),
            compiler_params=pltpu.CompilerParams(
                dimension_semantics=("parallel",),
                vmem_limit_bytes=vmem_limit,
            ),
        )

    try:
        out = _build(True)(x_in, *wb_flat)       # single-buffered resident weights
    except Exception:
        out = _build(False)(x_in, *wb_flat)      # fallback: default double-buffering

    if M_pad != M or n_out_pad != num_out:
        out = out[:M, :num_out]
    return out.reshape(*lead, num_out)


def init_mlp_params(key, num_in, num_inter, num_out, num_layers, dtype=jnp.float32):
    """Deterministic init mimicking nn.Linear (uniform(-1/sqrt(fan_in), +))."""
    dims = [num_in] + [num_inter] * (num_layers - 1) + [num_out]
    params = []
    for li in range(num_layers):
        fan_in, fan_out = dims[li], dims[li + 1]
        key, kw, kb = jax.random.split(key, 3)
        bound = 1.0 / math.sqrt(fan_in)
        w = jax.random.uniform(kw, (fan_in, fan_out), dtype, -bound, bound)
        b = jax.random.uniform(kb, (fan_out,), dtype, -bound, bound)
        params.append((w, b))
    return params


def _ref_forward(x, params, act="relu"):
    """Plain-JAX reference mirroring the kernel's bf16 matmul-operand cast."""
    act_fn = _ACT[act]
    h = x.reshape(-1, x.shape[-1])
    for idx, (w, b) in enumerate(params):
        a = h.astype(jnp.bfloat16).astype(jnp.float32)
        wf = w.astype(jnp.bfloat16).astype(jnp.float32)
        h = a @ wf + b.reshape(1, -1)
        if idx < len(params) - 1:
            h = act_fn(h)
    return h.reshape(*x.shape[:-1], params[-1][0].shape[1])


if __name__ == "__main__":
    key = jax.random.PRNGKey(0)
    num_in, num_inter, num_out, num_layers = 32, 64, 16, 3
    batch, seq = 2, 8

    key, kx = jax.random.split(key)
    x = jax.random.normal(kx, (batch, seq, num_in), jnp.float32)
    params = init_mlp_params(key, num_in, num_inter, num_out, num_layers)
    prepared = prepare_mlp_params(params)          # pad/cast weights ONCE (hoisted)

    out = jax.block_until_ready(mlp_forward(x, prepared))
    assert out.shape == (batch, seq, num_out)
    ref = _ref_forward(x, params)
    assert jnp.allclose(out, ref, atol=1e-3, rtol=1e-3), \
        float(jnp.max(jnp.abs(out - ref)))

    # Larger M: exercises the 512-row default tile, the v7x >=2-step grid split
    # (tm halved to 256 -> 2 parallel steps), and the no-pad f32 X fast path.
    key, kx2 = jax.random.split(key)
    x2 = jax.random.normal(kx2, (4, 128, num_in), jnp.float32)
    out2 = jax.block_until_ready(mlp_forward(x2, prepared))
    ref2 = _ref_forward(x2, params)
    assert out2.shape == (4, 128, num_out)
    assert jnp.allclose(out2, ref2, atol=1e-3, rtol=1e-3), \
        float(jnp.max(jnp.abs(out2 - ref2)))

    print("KERNEL_OK")
</pallas_src>

<mosaic_0001>
module attributes {stable_mosaic.version = 11 : i64} {
  func.func @kernel(%arg0: i32, %arg1: memref<16x32xf32, #tpu.memory_space<vmem>>, %arg2: memref<32x128xbf16, #tpu.memory_space<vmem>>, %arg3: memref<1x128xf32, #tpu.memory_space<vmem>>, %arg4: memref<128x128xbf16, #tpu.memory_space<vmem>>, %arg5: memref<1x128xf32, #tpu.memory_space<vmem>>, %arg6: memref<128x128xbf16, #tpu.memory_space<vmem>>, %arg7: memref<1x128xf32, #tpu.memory_space<vmem>>, %arg8: memref<16x128xf32, #tpu.memory_space<vmem>>, %arg9: memref<16x128xbf16, #tpu.memory_space<vmem>>, %arg10: memref<16x128xbf16, #tpu.memory_space<vmem>>) attributes {dimension_semantics = [#tpu.dimension_semantics<parallel>], iteration_bounds = array<i64: 1>, scalar_prefetch = 0 : i64, scratch_operands = 2 : i64, tpu.core_type = #tpu.core_type<tc>, window_params = [{transform_indices = @transform_0, window_bounds = array<i64: 16, 32>}, {pipeline_mode = #tpu.pipeline_mode<synchronous>, transform_indices = @transform_1, window_bounds = array<i64: 32, 128>}, {pipeline_mode = #tpu.pipeline_mode<synchronous>, transform_indices = @transform_2, window_bounds = array<i64: 1, 128>}, {pipeline_mode = #tpu.pipeline_mode<synchronous>, transform_indices = @transform_3, window_bounds = array<i64: 128, 128>}, {pipeline_mode = #tpu.pipeline_mode<synchronous>, transform_indices = @transform_4, window_bounds = array<i64: 1, 128>}, {pipeline_mode = #tpu.pipeline_mode<synchronous>, transform_indices = @transform_5, window_bounds = array<i64: 128, 128>}, {pipeline_mode = #tpu.pipeline_mode<synchronous>, transform_indices = @transform_6, window_bounds = array<i64: 1, 128>}, {transform_indices = @transform_7, window_bounds = array<i64: 16, 128>}]} {
    %c0 = arith.constant 0 : index
    %c0_0 = arith.constant 0 : index
    %0 = vector.load %arg1[%c0, %c0_0] : memref<16x32xf32, #tpu.memory_space<vmem>>, vector<16x32xf32>
    %1 = arith.truncf %0 : vector<16x32xf32> to vector<16x32xbf16>
    %c0_1 = arith.constant 0 : index
    %c0_2 = arith.constant 0 : index
    %2 = vector.load %arg2[%c0_1, %c0_2] : memref<32x128xbf16, #tpu.memory_space<vmem>>, vector<32x128xbf16>
    %cst = arith.constant dense<0.000000e+00> : vector<16x128xf32>
    %3 = tpu.matmul %1, %2, %cst {dimension_numbers = #tpu.dot_dimension_numbers<[1], [0], [0], [1], [0, 0, 1, 1], [], []>} : vector<16x32xbf16>, vector<32x128xbf16>, vector<16x128xf32> -> vector<16x128xf32>
    %c0_3 = arith.constant 0 : index
    %c0_4 = arith.constant 0 : index
    %4 = vector.load %arg3[%c0_3, %c0_4] : memref<1x128xf32, #tpu.memory_space<vmem>>, vector<1x128xf32>
    %5 = vector.broadcast %4 : vector<1x128xf32> to vector<16x128xf32>
    %6 = arith.addf %3, %5 : vector<16x128xf32>
    %cst_5 = arith.constant 0.000000e+00 : f32
    %7 = vector.broadcast %cst_5 : f32 to vector<16x128xf32>
    %8 = arith.maximumf %6, %7 : vector<16x128xf32>
    %9 = arith.truncf %8 : vector<16x128xf32> to vector<16x128xbf16>
    %c0_6 = arith.constant 0 : index
    %c0_7 = arith.constant 0 : index
    %10 = vector.load %arg9[%c0_6, %c0_7] : memref<16x128xbf16, #tpu.memory_space<vmem>>, vector<16x128xbf16>
    tpu.vector_store %arg9[%c0_6, %c0_7], %9 {strides = array<i32>} : memref<16x128xbf16, #tpu.memory_space<vmem>>, vector<16x128xbf16>,
    %c0_8 = arith.constant 0 : index
    %c0_9 = arith.constant 0 : index
    %11 = vector.load %arg9[%c0_8, %c0_9] : memref<16x128xbf16, #tpu.memory_space<vmem>>, vector<16x128xbf16>
    %c0_10 = arith.constant 0 : index
    %c0_11 = arith.constant 0 : index
    %12 = vector.load %arg4[%c0_10, %c0_11] : memref<128x128xbf16, #tpu.memory_space<vmem>>, vector<128x128xbf16>
    %cst_12 = arith.constant dense<0.000000e+00> : vector<16x128xf32>
    %13 = tpu.matmul %11, %12, %cst_12 {dimension_numbers = #tpu.dot_dimension_numbers<[1], [0], [0], [1], [0, 0, 1, 1], [], []>} : vector<16x128xbf16>, vector<128x128xbf16>, vector<16x128xf32> -> vector<16x128xf32>
    %c0_13 = arith.constant 0 : index
    %c0_14 = arith.constant 0 : index
    %14 = vector.load %arg5[%c0_13, %c0_14] : memref<1x128xf32, #tpu.memory_space<vmem>>, vector<1x128xf32>
    %15 = vector.broadcast %14 : vector<1x128xf32> to vector<16x128xf32>
    %16 = arith.addf %13, %15 : vector<16x128xf32>
    %cst_15 = arith.constant 0.000000e+00 : f32
    %17 = vector.broadcast %cst_15 : f32 to vector<16x128xf32>
    %18 = arith.maximumf %16, %17 : vector<16x128xf32>
    %19 = arith.truncf %18 : vector<16x128xf32> to vector<16x128xbf16>
    %c0_16 = arith.constant 0 : index
    %c0_17 = arith.constant 0 : index
    %20 = vector.load %arg10[%c0_16, %c0_17] : memref<16x128xbf16, #tpu.memory_space<vmem>>, vector<16x128xbf16>
    tpu.vector_store %arg10[%c0_16, %c0_17], %19 {strides = array<i32>} : memref<16x128xbf16, #tpu.memory_space<vmem>>, vector<16x128xbf16>,
    %c0_18 = arith.constant 0 : index
    %c0_19 = arith.constant 0 : index
    %21 = vector.load %arg10[%c0_18, %c0_19] : memref<16x128xbf16, #tpu.memory_space<vmem>>, vector<16x128xbf16>
    %c0_20 = arith.constant 0 : index
    %c0_21 = arith.constant 0 : index
    %22 = vector.load %arg6[%c0_20, %c0_21] : memref<128x128xbf16, #tpu.memory_space<vmem>>, vector<128x128xbf16>
    %cst_22 = arith.constant dense<0.000000e+00> : vector<16x128xf32>
    %23 = tpu.matmul %21, %22, %cst_22 {dimension_numbers = #tpu.dot_dimension_numbers<[1], [0], [0], [1], [0, 0, 1, 1], [], []>} : vector<16x128xbf16>, vector<128x128xbf16>, vector<16x128xf32> -> vector<16x128xf32>
    %c0_23 = arith.constant 0 : index
    %c0_24 = arith.constant 0 : index
    %24 = vector.load %arg7[%c0_23, %c0_24] : memref<1x128xf32, #tpu.memory_space<vmem>>, vector<1x128xf32>
    %25 = vector.broadcast %24 : vector<1x128xf32> to vector<16x128xf32>
    %26 = arith.addf %23, %25 : vector<16x128xf32>
    %c0_25 = arith.constant 0 : index
    %c0_26 = arith.constant 0 : index
    %27 = vector.load %arg8[%c0_25, %c0_26] : memref<16x128xf32, #tpu.memory_space<vmem>>, vector<16x128xf32>
    tpu.vector_store %arg8[%c0_25, %c0_26], %26 {strides = array<i32>} : memref<16x128xf32, #tpu.memory_space<vmem>>, vector<16x128xf32>,
    return
  }
  func.func @transform_0(%arg0: i32) -> (i32, i32) {
    %c0_i32 = arith.constant 0 : i32
    %c0_i32_0 = arith.constant 0 : i32
    return %arg0, %c0_i32 : i32, i32
  }
  func.func @transform_1(%arg0: i32) -> (i32, i32) {
    %c0_i32 = arith.constant 0 : i32
    %c0_i32_0 = arith.constant 0 : i32
    %c0_i32_1 = arith.constant 0 : i32
    return %c0_i32, %c0_i32_0 : i32, i32
  }
  func.func @transform_2(%arg0: i32) -> (i32, i32) {
    %c0_i32 = arith.constant 0 : i32
    %c0_i32_0 = arith.constant 0 : i32
    %c0_i32_1 = arith.constant 0 : i32
    return %c0_i32, %c0_i32_0 : i32, i32
  }
  func.func @transform_3(%arg0: i32) -> (i32, i32) {
    %c0_i32 = arith.constant 0 : i32
    %c0_i32_0 = arith.constant 0 : i32
    %c0_i32_1 = arith.constant 0 : i32
    return %c0_i32, %c0_i32_0 : i32, i32
  }
  func.func @transform_4(%arg0: i32) -> (i32, i32) {
    %c0_i32 = arith.constant 0 : i32
    %c0_i32_0 = arith.constant 0 : i32
    %c0_i32_1 = arith.constant 0 : i32
    return %c0_i32, %c0_i32_0 : i32, i32
  }
  func.func @transform_5(%arg0: i32) -> (i32, i32) {
    %c0_i32 = arith.constant 0 : i32
    %c0_i32_0 = arith.constant 0 : i32
    %c0_i32_1 = arith.constant 0 : i32
    return %c0_i32, %c0_i32_0 : i32, i32
  }
  func.func @transform_6(%arg0: i32) -> (i32, i32) {
    %c0_i32 = arith.constant 0 : i32
    %c0_i32_0 = arith.constant 0 : i32
    %c0_i32_1 = arith.constant 0 : i32
    return %c0_i32, %c0_i32_0 : i32, i32
  }
  func.func @transform_7(%arg0: i32) -> (i32, i32) {
    %c0_i32 = arith.constant 0 : i32
    %c0_i32_0 = arith.constant 0 : i32
    return %arg0, %c0_i32 : i32, i32
  }
}

module attributes {stable_mosaic.version = 11 : i64} {
  func.func @kernel(%arg0: i32, %arg1: memref<16x32xf32, #tpu.memory_space<vmem>>, %arg2: memref<32x128xbf16, #tpu.memory_space<vmem>>, %arg3: memref<1x128xf32, #tpu.memory_space<vmem>>, %arg4: memref<128x128xbf16, #tpu.memory_space<vmem>>, %arg5: memref<1x128xf32, #tpu.memory_space<vmem>>, %arg6: memref<128x128xbf16, #tpu.memory_space<vmem>>, %arg7: memref<1x128xf32, #tpu.memory_space<vmem>>, %arg8: memref<16x128xf32, #tpu.memory_space<vmem>>, %arg9: memref<16x128xbf16, #tpu.memory_space<vmem>>, %arg10: memref<16x128xbf16, #tpu.memory_space<vmem>>) attributes {dimension_semantics = [#tpu.dimension_semantics<parallel>], iteration_bounds = array<i64: 1>, scalar_prefetch = 0 : i64, scratch_operands = 2 : i64, tpu.core_type = #tpu.core_type<tc>, window_params = [{transform_indices = @transform_0, window_bounds = array<i64: 16, 32>}, {pipeline_mode = #tpu.pipeline_mode<synchronous>, transform_indices = @transform_1, window_bounds = array<i64: 32, 128>}, {pipeline_mode = #tpu.pipeline_mode<synchronous>, transform_indices = @transform_2, window_bounds = array<i64: 1, 128>}, {pipeline_mode = #tpu.pipeline_mode<synchronous>, transform_indices = @transform_3, window_bounds = array<i64: 128, 128>}, {pipeline_mode = #tpu.pipeline_mode<synchronous>, transform_indices = @transform_4, window_bounds = array<i64: 1, 128>}, {pipeline_mode = #tpu.pipeline_mode<synchronous>, transform_indices = @transform_5, window_bounds = array<i64: 128, 128>}, {pipeline_mode = #tpu.pipeline_mode<synchronous>, transform_indices = @transform_6, window_bounds = array<i64: 1, 128>}, {transform_indices = @transform_7, window_bounds = array<i64: 16, 128>}]} {
    %c0 = arith.constant 0 : index
    %c0_0 = arith.constant 0 : index
    %0 = vector.load %arg1[%c0, %c0_0] : memref<16x32xf32, #tpu.memory_space<vmem>>, vector<16x32xf32>
    %1 = arith.truncf %0 : vector<16x32xf32> to vector<16x32xbf16>
    %c0_1 = arith.constant 0 : index
    %c0_2 = arith.constant 0 : index
    %2 = vector.load %arg2[%c0_1, %c0_2] : memref<32x128xbf16, #tpu.memory_space<vmem>>, vector<32x128xbf16>
    %cst = arith.constant dense<0.000000e+00> : vector<16x128xf32>
    %3 = tpu.matmul %1, %2, %cst {dimension_numbers = #tpu.dot_dimension_numbers<[1], [0], [0], [1], [0, 0, 1, 1], [], []>} : vector<16x32xbf16>, vector<32x128xbf16>, vector<16x128xf32> -> vector<16x128xf32>
    %c0_3 = arith.constant 0 : index
    %c0_4 = arith.constant 0 : index
    %4 = vector.load %arg3[%c0_3, %c0_4] : memref<1x128xf32, #tpu.memory_space<vmem>>, vector<1x128xf32>
    %5 = vector.broadcast %4 : vector<1x128xf32> to vector<16x128xf32>
    %6 = arith.addf %3, %5 : vector<16x128xf32>
    %cst_5 = arith.constant 0.000000e+00 : f32
    %7 = vector.broadcast %cst_5 : f32 to vector<16x128xf32>
    %8 = arith.maximumf %6, %7 : vector<16x128xf32>
    %9 = arith.truncf %8 : vector<16x128xf32> to vector<16x128xbf16>
    %c0_6 = arith.constant 0 : index
    %c0_7 = arith.constant 0 : index
    %10 = vector.load %arg9[%c0_6, %c0_7] : memref<16x128xbf16, #tpu.memory_space<vmem>>, vector<16x128xbf16>
    tpu.vector_store %arg9[%c0_6, %c0_7], %9 {strides = array<i32>} : memref<16x128xbf16, #tpu.memory_space<vmem>>, vector<16x128xbf16>,
    %c0_8 = arith.constant 0 : index
    %c0_9 = arith.constant 0 : index
    %11 = vector.load %arg9[%c0_8, %c0_9] : memref<16x128xbf16, #tpu.memory_space<vmem>>, vector<16x128xbf16>
    %c0_10 = arith.constant 0 : index
    %c0_11 = arith.constant 0 : index
    %12 = vector.load %arg4[%c0_10, %c0_11] : memref<128x128xbf16, #tpu.memory_space<vmem>>, vector<128x128xbf16>
    %cst_12 = arith.constant dense<0.000000e+00> : vector<16x128xf32>
    %13 = tpu.matmul %11, %12, %cst_12 {dimension_numbers = #tpu.dot_dimension_numbers<[1], [0], [0], [1], [0, 0, 1, 1], [], []>} : vector<16x128xbf16>, vector<128x128xbf16>, vector<16x128xf32> -> vector<16x128xf32>
    %c0_13 = arith.constant 0 : index
    %c0_14 = arith.constant 0 : index
    %14 = vector.load %arg5[%c0_13, %c0_14] : memref<1x128xf32, #tpu.memory_space<vmem>>, vector<1x128xf32>
    %15 = vector.broadcast %14 : vector<1x128xf32> to vector<16x128xf32>
    %16 = arith.addf %13, %15 : vector<16x128xf32>
    %cst_15 = arith.constant 0.000000e+00 : f32
    %17 = vector.broadcast %cst_15 : f32 to vector<16x128xf32>
    %18 = arith.maximumf %16, %17 : vector<16x128xf32>
    %19 = arith.truncf %18 : vector<16x128xf32> to vector<16x128xbf16>
    %c0_16 = arith.constant 0 : index
    %c0_17 = arith.constant 0 : index
    %20 = vector.load %arg10[%c0_16, %c0_17] : memref<16x128xbf16, #tpu.memory_space<vmem>>, vector<16x128xbf16>
    tpu.vector_store %arg10[%c0_16, %c0_17], %19 {strides = array<i32>} : memref<16x128xbf16, #tpu.memory_space<vmem>>, vector<16x128xbf16>,
    %c0_18 = arith.constant 0 : index
    %c0_19 = arith.constant 0 : index
    %21 = vector.load %arg10[%c0_18, %c0_19] : memref<16x128xbf16, #tpu.memory_space<vmem>>, vector<16x128xbf16>
    %c0_20 = arith.constant 0 : index
    %c0_21 = arith.constant 0 : index
    %22 = vector.load %arg6[%c0_20, %c0_21] : memref<128x128xbf16, #tpu.memory_space<vmem>>, vector<128x128xbf16>
    %cst_22 = arith.constant dense<0.000000e+00> : vector<16x128xf32>
    %23 = tpu.matmul %21, %22, %cst_22 {dimension_numbers = #tpu.dot_dimension_numbers<[1], [0], [0], [1], [0, 0, 1, 1], [], []>} : vector<16x128xbf16>, vector<128x128xbf16>, vector<16x128xf32> -> vector<16x128xf32>
    %c0_23 = arith.constant 0 : index
    %c0_24 = arith.constant 0 : index
    %24 = vector.load %arg7[%c0_23, %c0_24] : memref<1x128xf32, #tpu.memory_space<vmem>>, vector<1x128xf32>
    %25 = vector.broadcast %24 : vector<1x128xf32> to vector<16x128xf32>
    %26 = arith.addf %23, %25 : vector<16x128xf32>
    %c0_25 = arith.constant 0 : index
    %c0_26 = arith.constant 0 : index
    %27 = vector.load %arg8[%c0_25, %c0_26] : memref<16x128xf32, #tpu.memory_space<vmem>>, vector<16x128xf32>
    tpu.vector_store %arg8[%c0_25, %c0_26], %26 {strides = array<i32>} : memref<16x128xf32, #tpu.memory_space<vmem>>, vector<16x128xf32>,
    return
  }
  func.func @transform_0(%arg0: i32) -> (i32, i32) {
    %c0_i32 = arith.constant 0 : i32
    %c0_i32_0 = arith.constant 0 : i32
    return %arg0, %c0_i32 : i32, i32
  }
  func.func @transform_1(%arg0: i32) -> (i32, i32) {
    %c0_i32 = arith.constant 0 : i32
    %c0_i32_0 = arith.constant 0 : i32
    %c0_i32_1 = arith.constant 0 : i32
    return %c0_i32, %c0_i32_0 : i32, i32
  }
  func.func @transform_2(%arg0: i32) -> (i32, i32) {
    %c0_i32 = arith.constant 0 : i32
    %c0_i32_0 = arith.constant 0 : i32
    %c0_i32_1 = arith.constant 0 : i32
    return %c0_i32, %c0_i32_0 : i32, i32
  }
  func.func @transform_3(%arg0: i32) -> (i32, i32) {
    %c0_i32 = arith.constant 0 : i32
    %c0_i32_0 = arith.constant 0 : i32
    %c0_i32_1 = arith.constant 0 : i32
    return %c0_i32, %c0_i32_0 : i32, i32
  }
  func.func @transform_4(%arg0: i32) -> (i32, i32) {
    %c0_i32 = arith.constant 0 : i32
    %c0_i32_0 = arith.constant 0 : i32
    %c0_i32_1 = arith.constant 0 : i32
    return %c0_i32, %c0_i32_0 : i32, i32
  }
  func.func @transform_5(%arg0: i32) -> (i32, i32) {
    %c0_i32 = arith.constant 0 : i32
    %c0_i32_0 = arith.constant 0 : i32
    %c0_i32_1 = arith.constant 0 : i32
    return %c0_i32, %c0_i32_0 : i32, i32
  }
  func.func @transform_6(%arg0: i32) -> (i32, i32) {
    %c0_i32 = arith.constant 0 : i32
    %c0_i32_0 = arith.constant 0 : i32
    %c0_i32_1 = arith.constant 0 : i32
    return %c0_i32, %c0_i32_0 : i32, i32
  }
  func.func @transform_7(%arg0: i32) -> (i32, i32) {
    %c0_i32 = arith.constant 0 : i32
    %c0_i32_0 = arith.constant 0 : i32
    return %arg0, %c0_i32 : i32, i32
  }
}

</mosaic_0001>

<llo_original>
// kernel: tpu_custom_call.1
$region0: #{tpu_custom_call.1}
  #allocation0 [shape = 'u32[]', space=smem, size = 0x4, offset = 0x4, fixed_abs, tag = 'smem constant byte address 0x4 - core index']
  #allocation1 [shape = 'u32[144,128]{1,0:T(1,128)}', space=vmem, size = 0x12000, scoped, tag = 'internal scratch']
  #allocation2 [shape = 'bf16[16,128]{1,0:T(8,128)(2,1)}', space=vmem, size = 0x1000, scoped, tag = 'scratch operand']
  #allocation3 [shape = 'bf16[16,128]{1,0:T(8,128)(2,1)}', space=vmem, size = 0x1000, scoped, tag = 'scratch operand']
  %s0 = inlined_call_operand.hbm [shape: f32[16,32], index: 0, kind: input, shape index: {}]
  %s1 = inlined_call_operand.hbm [shape: bf16[32,128], index: 1, kind: input, shape index: {}]
  %s2 = inlined_call_operand.vmem [shape: f32[1,128], index: 2, kind: input, shape index: {}]
  %s3 = inlined_call_operand.hbm [shape: bf16[128,128], index: 3, kind: input, shape index: {}]
  %s4 = inlined_call_operand.vmem [shape: f32[1,128], index: 4, kind: input, shape index: {}]
  %s5 = inlined_call_operand.hbm [shape: bf16[128,128], index: 5, kind: input, shape index: {}]
  %s6 = inlined_call_operand.vmem [shape: f32[1,128], index: 6, kind: input, shape index: {}]
  %s7 = inlined_call_operand.hbm [shape: f32[16,128], index: 7, kind: output, shape index: {}]
  %s8 = sld [smem:[#allocation0]]
  $region54: #{tpu_custom_call.1} parent=0
    _
  %s10 = ssub.s32 1, %s8
  %s11 = scalar_select 0, %s10, %s8
  $region1: #{tpu_custom_call.1} parent=0
    #allocation4 [shape = 'u8[8192]{0}', space=vmem, size = 0x2000, scoped, tag = 'input window, operand 0, single buffered']
    #allocation5 [shape = 's32[1]{0}', space=sflag, size = 0x4, scoped, tag = 'scoped memory for tpu_custom_call.1']
    #allocation6 [shape = 's32[1]{0}', space=sflag, size = 0x4, scoped, tag = 'scoped memory for tpu_custom_call.1']
    #allocation7 [shape = 'u8[8192]{0}', space=vmem, size = 0x2000, scoped, tag = 'input window, operand 1, single buffered']
    #allocation8 [shape = 's32[1]{0}', space=sflag, size = 0x4, scoped, tag = 'scoped memory for tpu_custom_call.1']
    #allocation9 [shape = 'u8[32768]{0}', space=vmem, size = 0x8000, scoped, tag = 'input window, operand 3, single buffered']
    #allocation10 [shape = 'u8[32768]{0}', space=vmem, size = 0x8000, scoped, tag = 'input window, operand 5, single buffered']
    #allocation11 [shape = 's32[1]{0}', space=sflag, size = 0x4, scoped, tag = 'scoped memory for tpu_custom_call.1']
    #allocation12 [shape = 'u8[8192]{0}', space=vmem, size = 0x2000, scoped, tag = 'output window, operand 0, single buffered']
    %12 = vsyncpa [#allocation5], 0
    %13 = vsyncpa [#allocation8], 0
    %14 = vsyncpa [#allocation11], 0
    %15 = vsyncpa [#allocation6], 0
    // Predicated region
    $region2: #{tpu_custom_call.1} parent=1 // pred_check
      _
    $region3: #{tpu_custom_call.1} parent=1 // pred_check_branch
      %17 = sbr.rel (0) target = $region5
    $region4: #{tpu_custom_call.1} parent=1 // pred_region
      %s19 = ssub.s32 256, 256
      %20 = vsyncadd [#allocation5], %s19
      %s21 = sshll.u32 [#allocation4], 4
      %s22 = int_to_ptr.vmem [resolvable:$true] %s21
      %27 = dma.hbm_to_vmem [thread:$0]  %s0, 256, %s22, [#allocation5], 128, 128, 8
    $region5: #{tpu_custom_call.1} parent=1 // pred_fallthru
      _
    // Predicated region
    $region6: #{tpu_custom_call.1} parent=1 // pred_check
      _
    $region7: #{tpu_custom_call.1} parent=1 // pred_check_branch
      %29 = sbr.rel (0) target = $region9
    $region8: #{tpu_custom_call.1} parent=1 // pred_region
      %s31 = ssub.s32 256, 256
      %32 = vsyncadd [#allocation8], %s31
      %s33 = sshll.u32 [#allocation7], 4
      %s34 = int_to_ptr.vmem [resolvable:$true] %s33
      %39 = dma.hbm_to_vmem [thread:$0]  %s1, 256, %s34, [#allocation8], 64, 64, 4
    $region9: #{tpu_custom_call.1} parent=1 // pred_fallthru
      _
    // Predicated region
    $region10: #{tpu_custom_call.1} parent=1 // pred_check
      _
    $region11: #{tpu_custom_call.1} parent=1 // pred_check_branch
      %41 = sbr.rel (0) target = $region13
    $region12: #{tpu_custom_call.1} parent=1 // pred_region
      _
    $region13: #{tpu_custom_call.1} parent=1 // pred_fallthru
      _
    // Predicated region
    $region14: #{tpu_custom_call.1} parent=1 // pred_check
      _
    $region15: #{tpu_custom_call.1} parent=1 // pred_check_branch
      %43 = sbr.rel (0) target = $region17
    $region16: #{tpu_custom_call.1} parent=1 // pred_region
      %s45 = ssub.s32 1024, 1024
      %46 = vsyncadd [#allocation8], %s45
      %s47 = sshll.u32 [#allocation9], 4
      %s48 = int_to_ptr.vmem [resolvable:$true] %s47
      %53 = dma.hbm_to_vmem [thread:$0]  %s3, 1024, %s48, [#allocation8], 64, 64, 4
    $region17: #{tpu_custom_call.1} parent=1 // pred_fallthru
      _
    // Predicated region
    $region18: #{tpu_custom_call.1} parent=1 // pred_check
      _
    $region19: #{tpu_custom_call.1} parent=1 // pred_check_branch
      %55 = sbr.rel (0) target = $region21
    $region20: #{tpu_custom_call.1} parent=1 // pred_region
      _
    $region21: #{tpu_custom_call.1} parent=1 // pred_fallthru
      _
    // Predicated region
    $region22: #{tpu_custom_call.1} parent=1 // pred_check
      _
    $region23: #{tpu_custom_call.1} parent=1 // pred_check_branch
      %57 = sbr.rel (0) target = $region25
    $region24: #{tpu_custom_call.1} parent=1 // pred_region
      %s59 = ssub.s32 1024, 1024
      %60 = vsyncadd [#allocation11], %s59
      %s61 = sshll.u32 [#allocation10], 4
      %s62 = int_to_ptr.vmem [resolvable:$true] %s61
      %67 = dma.hbm_to_vmem [thread:$0]  %s5, 1024, %s62, [#allocation11], 64, 64, 4
    $region25: #{tpu_custom_call.1} parent=1 // pred_fallthru
      _
    // Predicated region
    $region26: #{tpu_custom_call.1} parent=1 // pred_check
      _
    $region27: #{tpu_custom_call.1} parent=1 // pred_check_branch
      %69 = sbr.rel (0) target = $region29
    $region28: #{tpu_custom_call.1} parent=1 // pred_region
      _
    $region29: #{tpu_custom_call.1} parent=1 // pred_fallthru
      _
    // Predicated region
    $region30: #{tpu_custom_call.1} parent=1 // pred_check
      _
    $region31: #{tpu_custom_call.1} parent=1 // pred_check_branch
      %71 = sbr.rel (0) target = $region33
    $region32: #{tpu_custom_call.1} parent=1 // pred_region
      %72 = dma.done [#allocation5], 256
    $region33: #{tpu_custom_call.1} parent=1 // pred_fallthru
      _
    // Predicated region
    $region34: #{tpu_custom_call.1} parent=1 // pred_check
      _
    $region35: #{tpu_custom_call.1} parent=1 // pred_check_branch
      %74 = sbr.rel (0) target = $region37
    $region36: #{tpu_custom_call.1} parent=1 // pred_region
      %75 = dma.done [#allocation8], 256
    $region37: #{tpu_custom_call.1} parent=1 // pred_fallthru
      _
    // Predicated region
    $region38: #{tpu_custom_call.1} parent=1 // pred_check
      _
    $region39: #{tpu_custom_call.1} parent=1 // pred_check_branch
      %77 = sbr.rel (0) target = $region41
    $region40: #{tpu_custom_call.1} parent=1 // pred_region
      %78 = dma.done [#allocation8], 1024
    $region41: #{tpu_custom_call.1} parent=1 // pred_fallthru
      _
    // Predicated region
    $region42: #{tpu_custom_call.1} parent=1 // pred_check
      _
    $region43: #{tpu_custom_call.1} parent=1 // pred_check_branch
      %80 = sbr.rel (0) target = $region45
    $region44: #{tpu_custom_call.1} parent=1 // pred_region
      %81 = dma.done [#allocation11], 1024
    $region45: #{tpu_custom_call.1} parent=1 // pred_fallthru
      _
    %v83 = vld [vmem:[#allocation4] sm:$0xff]
    %v84 = vld [vmem:[#allocation4 + $0x8] sm:$0xff]
    %v85 = vpack.c.bf16 %v84, %v83
    %v86 = vld [vmem:[#allocation7] sm:$0xf]
    %v87 = vld [vmem:[#allocation7 + $0x4] sm:$0xf]
    %v88 = vld [vmem:[#allocation7 + $0x8] sm:$0xf]
    %v89 = vld [vmem:[#allocation7 + $0xc] sm:$0xf]
    %v90 = vld [vmem:[%s2] sm:$0x1]
    %v92 = vlaneseq
    %v93 = vshrl.u32 %v92, 7
    %v94 = vsub.s32 0, %v93
    %v95 = vrot.slane %v90, %v94
    %v101 = vunpack.c.l.b16 %v86
    %v102 = vunpack.c.l.b16 %v87
    %v103 = vunpack.c.l.b16 %v88
    %v104 = vunpack.c.l.b16 %v89
    %v105 = vpack.c.b16 %v102, %v101
    %v106 = vpack.c.b16 %v104, %v103
    %vm109 = vcmask 261120
    %v111 = vsel %vm109, %v85, 0
    %113 = vmatprep.subr.bf16.mxu0 0
    %114 = vmatpush1.bf16.msra.mxu0 0
    %115 = vmatprep.subr.bf16.mxu0 0
    %116 = vmatpush1.bf16.msra.mxu0 0
    %117 = vmatprep.subr.bf16.mxu0 0
    %118 = vmatpush1.bf16.msra.mxu0 0
    %119 = vmatprep.subr.bf16.mxu0 0
    %120 = vmatpush1.bf16.msra.mxu0 0
    %121 = vmatprep.subr.bf16.mxu0 0
    %122 = vmatpush1.bf16.msra.mxu0 0
    %123 = vmatprep.subr.bf16.mxu0 0
    %124 = vmatpush1.bf16.msra.mxu0 0
    %125 = vmatprep.subr.bf16.mxu0 0
    %126 = vmatpush1.bf16.msra.mxu0 %v106
    %127 = vmatprep.subr.bf16.mxu0 0
    %128 = vmatpush1.bf16.msra.mxu0 %v105
    %129 = vmatprep.subr.bf16.mxu0 0
    %130 = vmatpush2.bf16.msra.mxu0 0
    %131 = vmatprep.subr.bf16.mxu0 0
    %132 = vmatpush2.bf16.msra.mxu0 0
    %133 = vmatprep.subr.bf16.mxu0 0
    %134 = vmatpush2.bf16.msra.mxu0 0
    %135 = vmatprep.subr.bf16.mxu0 0
    %136 = vmatpush2.bf16.msra.mxu0 0
    %137 = vmatprep.subr.bf16.mxu0 0
    %138 = vmatpush2.bf16.msra.mxu0 0
    %139 = vmatprep.subr.bf16.mxu0 0
    %140 = vmatpush2.bf16.msra.mxu0 0
    %141 = vmatprep.subr.bf16.mxu0 0
    %142 = vmatpush2.bf16.msra.mxu0 0
    %143 = vmatprep.subr.bf16.mxu0 0
    %144 = vmatpush2.bf16.msra.mxu0 0
    %145 = vmatprep.mubr.bf16.mxu0 0
    %146 = vmatmul.mubr.bf16.gmra.mxu0 %v111
    %v147 = vpop.f32.mrf.mxu0
    %v148 = vadd.f32 %v95, %v147
    %v149 = vpop.f32.mrf.mxu0
    %v150 = vpop.f32.mrf.mxu0
    %v151 = vadd.f32 %v95, %v150
    %v152 = vpop.f32.mrf.mxu0
    %153 = vdwg.mxu0
    %v154 = vmax.f32 %v148, 0.0
    %v155 = vmax.f32 %v151, 0.0
    %v156 = vpack.c.bf16 %v155, %v154
    %v158 = vunpack.c.l.b16 %v156
    %v159 = vunpack.c.h.b16 %v156
    %v160 = vpack.c.b16 %v158, %v158
    %v161 = vpack.c.b16 %v159, %v159
    %164 = vst [vmem:[#allocation2] sm:$0xf] %v160
    %165 = vst [vmem:[#allocation2 + $0x4] sm:$0xf] %v161
    %v166 = vld [vmem:[#allocation2] sm:$0xf]
    %v167 = vld [vmem:[#allocation2 + $0x4] sm:$0xf]
    %v168 = vld [vmem:[#allocation9] sm:$0xf]
    %v169 = vld [vmem:[#allocation9 + $0x4] sm:$0xf]
    %v170 = vld [vmem:[#allocation9 + $0x8] sm:$0xf]
    %v171 = vld [vmem:[#allocation9 + $0xc] sm:$0xf]
    %v172 = vld [vmem:[#allocation9 + $0x10] sm:$0xf]
    %v173 = vld [vmem:[#allocation9 + $0x14] sm:$0xf]
    %v174 = vld [vmem:[#allocation9 + $0x18] sm:$0xf]
    %v175 = vld [vmem:[#allocation9 + $0x1c] sm:$0xf]
    %v176 = vld [vmem:[#allocation9 + $0x20] sm:$0xf]
    %v177 = vld [vmem:[#allocation9 + $0x24] sm:$0xf]
    %v178 = vld [vmem:[#allocation9 + $0x28] sm:$0xf]
    %v179 = vld [vmem:[#allocation9 + $0x2c] sm:$0xf]
    %v180 = vld [vmem:[#allocation9 + $0x30] sm:$0xf]
    %v181 = vld [vmem:[#allocation9 + $0x34] sm:$0xf]
    %v182 = vld [vmem:[#allocation9 + $0x38] sm:$0xf]
    %v183 = vld [vmem:[#allocation9 + $0x3c] sm:$0xf]
    %v184 = vld [vmem:[%s4] sm:$0x1]
    %v186 = vlaneseq
    %v187 = vshrl.u32 %v186, 7
    %v188 = vsub.s32 0, %v187
    %v189 = vrot.slane %v184, %v188
    %v193 = vunpack.c.l.b16 %v166
    %v194 = vunpack.c.l.b16 %v167
    %v195 = vpack.c.b16 %v194, %v193
    %v213 = vunpack.c.l.b16 %v168
    %v214 = vunpack.c.l.b16 %v169
    %v215 = vunpack.c.l.b16 %v170
    %v216 = vunpack.c.l.b16 %v171
    %v217 = vunpack.c.l.b16 %v172
    %v218 = vunpack.c.l.b16 %v173
    %v219 = vunpack.c.l.b16 %v174
    %v220 = vunpack.c.l.b16 %v175
    %v221 = vunpack.c.l.b16 %v176
    %v222 = vunpack.c.l.b16 %v177
    %v223 = vunpack.c.l.b16 %v178
    %v224 = vunpack.c.l.b16 %v179
    %v225 = vunpack.c.l.b16 %v180
    %v226 = vunpack.c.l.b16 %v181
    %v227 = vunpack.c.l.b16 %v182
    %v228 = vunpack.c.l.b16 %v183
    %v229 = vpack.c.b16 %v214, %v213
    %v230 = vpack.c.b16 %v216, %v215
    %v231 = vpack.c.b16 %v218, %v217
    %v232 = vpack.c.b16 %v220, %v219
    %v233 = vpack.c.b16 %v222, %v221
    %v234 = vpack.c.b16 %v224, %v223
    %v235 = vpack.c.b16 %v226, %v225
    %v236 = vpack.c.b16 %v228, %v227
    %245 = vmatprep.subr.bf16.mxu0 0
    %246 = vmatpush1.bf16.msra.mxu0 %v236
    %247 = vmatprep.subr.bf16.mxu0 0
    %248 = vmatpush1.bf16.msra.mxu0 %v235
    %249 = vmatprep.subr.bf16.mxu0 0
    %250 = vmatpush1.bf16.msra.mxu0 %v234
    %251 = vmatprep.subr.bf16.mxu0 0
    %252 = vmatpush1.bf16.msra.mxu0 %v233
    %253 = vmatprep.subr.bf16.mxu0 0
    %254 = vmatpush1.bf16.msra.mxu0 %v232
    %255 = vmatprep.subr.bf16.mxu0 0
    %256 = vmatpush1.bf16.msra.mxu0 %v231
    %257 = vmatprep.subr.bf16.mxu0 0
    %258 = vmatpush1.bf16.msra.mxu0 %v230
    %259 = vmatprep.subr.bf16.mxu0 0
    %260 = vmatpush1.bf16.msra.mxu0 %v229
    %261 = vmatprep.subr.bf16.mxu0 0
    %262 = vmatpush2.bf16.msra.mxu0 0
    %263 = vmatprep.subr.bf16.mxu0 0
    %264 = vmatpush2.bf16.msra.mxu0 0
    %265 = vmatprep.subr.bf16.mxu0 0
    %266 = vmatpush2.bf16.msra.mxu0 0
    %267 = vmatprep.subr.bf16.mxu0 0
    %268 = vmatpush2.bf16.msra.mxu0 0
    %269 = vmatprep.subr.bf16.mxu0 0
    %270 = vmatpush2.bf16.msra.mxu0 0
    %271 = vmatprep.subr.bf16.mxu0 0
    %272 = vmatpush2.bf16.msra.mxu0 0
    %273 = vmatprep.subr.bf16.mxu0 0
    %274 = vmatpush2.bf16.msra.mxu0 0
    %275 = vmatprep.subr.bf16.mxu0 0
    %276 = vmatpush2.bf16.msra.mxu0 0
    %277 = vmatprep.mubr.bf16.mxu0 0
    %278 = vmatmul.mubr.bf16.gmra.mxu0 %v195
    %v279 = vpop.f32.mrf.mxu0
    %v280 = vadd.f32 %v189, %v279
    %v281 = vpop.f32.mrf.mxu0
    %v282 = vpop.f32.mrf.mxu0
    %v283 = vadd.f32 %v189, %v282
    %v284 = vpop.f32.mrf.mxu0
    %285 = vdwg.mxu0
    %v286 = vmax.f32 %v280, 0.0
    %v287 = vmax.f32 %v283, 0.0
    %v288 = vpack.c.bf16 %v287, %v286
    %v290 = vunpack.c.l.b16 %v288
    %v291 = vunpack.c.h.b16 %v288
    %v292 = vpack.c.b16 %v290, %v290
    %v293 = vpack.c.b16 %v291, %v291
    %296 = vst [vmem:[#allocation3] sm:$0xf] %v292
    %297 = vst [vmem:[#allocation3 + $0x4] sm:$0xf] %v293
    %v298 = vld [vmem:[#allocation3] sm:$0xf]
    %v299 = vld [vmem:[#allocation3 + $0x4] sm:$0xf]
    %v300 = vld [vmem:[#allocation10] sm:$0xf]
    %v301 = vld [vmem:[#allocation10 + $0x4] sm:$0xf]
    %v302 = vld [vmem:[#allocation10 + $0x8] sm:$0xf]
    %v303 = vld [vmem:[#allocation10 + $0xc] sm:$0xf]
    %v304 = vld [vmem:[#allocation10 + $0x10] sm:$0xf]
    %v305 = vld [vmem:[#allocation10 + $0x14] sm:$0xf]
    %v306 = vld [vmem:[#allocation10 + $0x18] sm:$0xf]
    %v307 = vld [vmem:[#allocation10 + $0x1c] sm:$0xf]
    %v308 = vld [vmem:[#allocation10 + $0x20] sm:$0xf]
    %v309 = vld [vmem:[#allocation10 + $0x24] sm:$0xf]
    %v310 = vld [vmem:[#allocation10 + $0x28] sm:$0xf]
    %v311 = vld [vmem:[#allocation10 + $0x2c] sm:$0xf]
    %v312 = vld [vmem:[#allocation10 + $0x30] sm:$0xf]
    %v313 = vld [vmem:[#allocation10 + $0x34] sm:$0xf]
    %v314 = vld [vmem:[#allocation10 + $0x38] sm:$0xf]
    %v315 = vld [vmem:[#allocation10 + $0x3c] sm:$0xf]
    %v316 = vld [vmem:[%s6] sm:$0x1]
    %v318 = vlaneseq
    %v319 = vshrl.u32 %v318, 7
    %v320 = vsub.s32 0, %v319
    %v321 = vrot.slane %v316, %v320
    %v325 = vunpack.c.l.b16 %v298
    %v326 = vunpack.c.l.b16 %v299
    %v327 = vpack.c.b16 %v326, %v325
    %v345 = vunpack.c.l.b16 %v300
    %v346 = vunpack.c.l.b16 %v301
    %v347 = vunpack.c.l.b16 %v302
    %v348 = vunpack.c.l.b16 %v303
    %v349 = vunpack.c.l.b16 %v304
    %v350 = vunpack.c.l.b16 %v305
    %v351 = vunpack.c.l.b16 %v306
    %v352 = vunpack.c.l.b16 %v307
    %v353 = vunpack.c.l.b16 %v308
    %v354 = vunpack.c.l.b16 %v309
    %v355 = vunpack.c.l.b16 %v310
    %v356 = vunpack.c.l.b16 %v311
    %v357 = vunpack.c.l.b16 %v312
    %v358 = vunpack.c.l.b16 %v313
    %v359 = vunpack.c.l.b16 %v314
    %v360 = vunpack.c.l.b16 %v315
    %v361 = vpack.c.b16 %v346, %v345
    %v362 = vpack.c.b16 %v348, %v347
    %v363 = vpack.c.b16 %v350, %v349
    %v364 = vpack.c.b16 %v352, %v351
    %v365 = vpack.c.b16 %v354, %v353
    %v366 = vpack.c.b16 %v356, %v355
    %v367 = vpack.c.b16 %v358, %v357
    %v368 = vpack.c.b16 %v360, %v359
    %377 = vmatprep.subr.bf16.mxu0 0
    %378 = vmatpush1.bf16.msra.mxu0 %v368
    %379 = vmatprep.subr.bf16.mxu0 0
    %380 = vmatpush1.bf16.msra.mxu0 %v367
    %381 = vmatprep.subr.bf16.mxu0 0
    %382 = vmatpush1.bf16.msra.mxu0 %v366
    %383 = vmatprep.subr.bf16.mxu0 0
    %384 = vmatpush1.bf16.msra.mxu0 %v365
    %385 = vmatprep.subr.bf16.mxu0 0
    %386 = vmatpush1.bf16.msra.mxu0 %v364
    %387 = vmatprep.subr.bf16.mxu0 0
    %388 = vmatpush1.bf16.msra.mxu0 %v363
    %389 = vmatprep.subr.bf16.mxu0 0
    %390 = vmatpush1.bf16.msra.mxu0 %v362
    %391 = vmatprep.subr.bf16.mxu0 0
    %392 = vmatpush1.bf16.msra.mxu0 %v361
    %393 = vmatprep.subr.bf16.mxu0 0
    %394 = vmatpush2.bf16.msra.mxu0 0
    %395 = vmatprep.subr.bf16.mxu0 0
    %396 = vmatpush2.bf16.msra.mxu0 0
    %397 = vmatprep.subr.bf16.mxu0 0
    %398 = vmatpush2.bf16.msra.mxu0 0
    %399 = vmatprep.subr.bf16.mxu0 0
    %400 = vmatpush2.bf16.msra.mxu0 0
    %401 = vmatprep.subr.bf16.mxu0 0
    %402 = vmatpush2.bf16.msra.mxu0 0
    %403 = vmatprep.subr.bf16.mxu0 0
    %404 = vmatpush2.bf16.msra.mxu0 0
    %405 = vmatprep.subr.bf16.mxu0 0
    %406 = vmatpush2.bf16.msra.mxu0 0
    %407 = vmatprep.subr.bf16.mxu0 0
    %408 = vmatpush2.bf16.msra.mxu0 0
    %409 = vmatprep.mubr.bf16.mxu0 0
    %410 = vmatmul.mubr.bf16.gmra.mxu0 %v327
    %v411 = vpop.f32.mrf.mxu0
    %v412 = vadd.f32 %v321, %v411
    %v413 = vpop.f32.mrf.mxu0
    %v414 = vpop.f32.mrf.mxu0
    %v415 = vadd.f32 %v321, %v414
    %v416 = vpop.f32.mrf.mxu0
    %417 = vdwg.mxu0
    %418 = vst [vmem:[#allocation12] sm:$0xff] %v412
    %419 = vst [vmem:[#allocation12 + $0x8] sm:$0xff] %v415
    // Predicated region
    $region46: #{tpu_custom_call.1} parent=1 // pred_check
      _
    $region47: #{tpu_custom_call.1} parent=1 // pred_check_branch
      %421 = sbr.rel (0) target = $region49
    $region48: #{tpu_custom_call.1} parent=1 // pred_region
      %s423 = ssub.s32 256, 256
      %424 = vsyncadd [#allocation6], %s423
      %s425 = sshll.u32 [#allocation12], 4
      %s426 = int_to_ptr.vmem [resolvable:$true] %s425
      %431 = dma.vmem_to_hbm [thread:$0]  %s426, 256, %s7, [#allocation6], 128, 128, 8
    $region49: #{tpu_custom_call.1} parent=1 // pred_fallthru
      _
    // Predicated region
    $region50: #{tpu_custom_call.1} parent=1 // pred_check
      _
    $region51: #{tpu_custom_call.1} parent=1 // pred_check_branch
      %433 = sbr.rel (0) target = $region53
    $region52: #{tpu_custom_call.1} parent=1 // pred_region
      %434 = dma.done [#allocation6], 256
    $region53: #{tpu_custom_call.1} parent=1 // pred_fallthru
      _
    %435 = vsyncpa [#allocation5], 1
    %436 = vsyncpa [#allocation8], 1
    %437 = vsyncpa [#allocation11], 1
    %438 = vsyncpa [#allocation6], 1

// kernel: tpu_custom_call.1
$region0: #{tpu_custom_call.1}
  #allocation0 [shape = 'u32[]', space=smem, size = 0x4, offset = 0x4, fixed_abs, tag = 'smem constant byte address 0x4 - core index']
  #allocation1 [shape = 'u32[144,128]{1,0:T(1,128)}', space=vmem, size = 0x12000, scoped, tag = 'internal scratch']
  #allocation2 [shape = 'bf16[16,128]{1,0:T(8,128)(2,1)}', space=vmem, size = 0x1000, scoped, tag = 'scratch operand']
  #allocation3 [shape = 'bf16[16,128]{1,0:T(8,128)(2,1)}', space=vmem, size = 0x1000, scoped, tag = 'scratch operand']
  %s0 = inlined_call_operand.hbm [shape: f32[16,32], index: 0, kind: input, shape index: {}]
  %s1 = inlined_call_operand.hbm [shape: bf16[32,128], index: 1, kind: input, shape index: {}]
  %s2 = inlined_call_operand.vmem [shape: f32[1,128], index: 2, kind: input, shape index: {}]
  %s3 = inlined_call_operand.hbm [shape: bf16[128,128], index: 3, kind: input, shape index: {}]
  %s4 = inlined_call_operand.vmem [shape: f32[1,128], index: 4, kind: input, shape index: {}]
  %s5 = inlined_call_operand.hbm [shape: bf16[128,128], index: 5, kind: input, shape index: {}]
  %s6 = inlined_call_operand.vmem [shape: f32[1,128], index: 6, kind: input, shape index: {}]
  %s7 = inlined_call_operand.hbm [shape: f32[16,128], index: 7, kind: output, shape index: {}]
  %s8 = sld [smem:[#allocation0]]
  $region54: #{tpu_custom_call.1} parent=0
    _
  %s10 = ssub.s32 1, %s8
  %s11 = scalar_select 0, %s10, %s8
  $region1: #{tpu_custom_call.1} parent=0
    #allocation4 [shape = 'u8[8192]{0}', space=vmem, size = 0x2000, scoped, tag = 'input window, operand 0, single buffered']
    #allocation5 [shape = 's32[1]{0}', space=sflag, size = 0x4, scoped, tag = 'scoped memory for tpu_custom_call.1']
    #allocation6 [shape = 's32[1]{0}', space=sflag, size = 0x4, scoped, tag = 'scoped memory for tpu_custom_call.1']
    #allocation7 [shape = 'u8[8192]{0}', space=vmem, size = 0x2000, scoped, tag = 'input window, operand 1, single buffered']
    #allocation8 [shape = 's32[1]{0}', space=sflag, size = 0x4, scoped, tag = 'scoped memory for tpu_custom_call.1']
    #allocation9 [shape = 'u8[32768]{0}', space=vmem, size = 0x8000, scoped, tag = 'input window, operand 3, single buffered']
    #allocation10 [shape = 'u8[32768]{0}', space=vmem, size = 0x8000, scoped, tag = 'input window, operand 5, single buffered']
    #allocation11 [shape = 's32[1]{0}', space=sflag, size = 0x4, scoped, tag = 'scoped memory for tpu_custom_call.1']
    #allocation12 [shape = 'u8[8192]{0}', space=vmem, size = 0x2000, scoped, tag = 'output window, operand 0, single buffered']
    %12 = vsyncpa [#allocation5], 0
    %13 = vsyncpa [#allocation8], 0
    %14 = vsyncpa [#allocation11], 0
    %15 = vsyncpa [#allocation6], 0
    // Predicated region
    $region2: #{tpu_custom_call.1} parent=1 // pred_check
      _
    $region3: #{tpu_custom_call.1} parent=1 // pred_check_branch
      %17 = sbr.rel (0) target = $region5
    $region4: #{tpu_custom_call.1} parent=1 // pred_region
      %s19 = ssub.s32 256, 256
      %20 = vsyncadd [#allocation5], %s19
      %s21 = sshll.u32 [#allocation4], 4
      %s22 = int_to_ptr.vmem [resolvable:$true] %s21
      %27 = dma.hbm_to_vmem [thread:$0]  %s0, 256, %s22, [#allocation5], 128, 128, 8
    $region5: #{tpu_custom_call.1} parent=1 // pred_fallthru
      _
    // Predicated region
    $region6: #{tpu_custom_call.1} parent=1 // pred_check
      _
    $region7: #{tpu_custom_call.1} parent=1 // pred_check_branch
      %29 = sbr.rel (0) target = $region9
    $region8: #{tpu_custom_call.1} parent=1 // pred_region
      %s31 = ssub.s32 256, 256
      %32 = vsyncadd [#allocation8], %s31
      %s33 = sshll.u32 [#allocation7], 4
      %s34 = int_to_ptr.vmem [resolvable:$true] %s33
      %39 = dma.hbm_to_vmem [thread:$0]  %s1, 256, %s34, [#allocation8], 64, 64, 4
    $region9: #{tpu_custom_call.1} parent=1 // pred_fallthru
      _
    // Predicated region
    $region10: #{tpu_custom_call.1} parent=1 // pred_check
      _
    $region11: #{tpu_custom_call.1} parent=1 // pred_check_branch
      %41 = sbr.rel (0) target = $region13
    $region12: #{tpu_custom_call.1} parent=1 // pred_region
      _
    $region13: #{tpu_custom_call.1} parent=1 // pred_fallthru
      _
    // Predicated region
    $region14: #{tpu_custom_call.1} parent=1 // pred_check
      _
    $region15: #{tpu_custom_call.1} parent=1 // pred_check_branch
      %43 = sbr.rel (0) target = $region17
    $region16: #{tpu_custom_call.1} parent=1 // pred_region
      %s45 = ssub.s32 1024, 1024
      %46 = vsyncadd [#allocation8], %s45
      %s47 = sshll.u32 [#allocation9], 4
      %s48 = int_to_ptr.vmem [resolvable:$true] %s47
      %53 = dma.hbm_to_vmem [thread:$0]  %s3, 1024, %s48, [#allocation8], 64, 64, 4
    $region17: #{tpu_custom_call.1} parent=1 // pred_fallthru
      _
    // Predicated region
    $region18: #{tpu_custom_call.1} parent=1 // pred_check
      _
    $region19: #{tpu_custom_call.1} parent=1 // pred_check_branch
      %55 = sbr.rel (0) target = $region21
    $region20: #{tpu_custom_call.1} parent=1 // pred_region
      _
    $region21: #{tpu_custom_call.1} parent=1 // pred_fallthru
      _
    // Predicated region
    $region22: #{tpu_custom_call.1} parent=1 // pred_check
      _
    $region23: #{tpu_custom_call.1} parent=1 // pred_check_branch
      %57 = sbr.rel (0) target = $region25
    $region24: #{tpu_custom_call.1} parent=1 // pred_region
      %s59 = ssub.s32 1024, 1024
      %60 = vsyncadd [#allocation11], %s59
      %s61 = sshll.u32 [#allocation10], 4
      %s62 = int_to_ptr.vmem [resolvable:$true] %s61
      %67 = dma.hbm_to_vmem [thread:$0]  %s5, 1024, %s62, [#allocation11], 64, 64, 4
    $region25: #{tpu_custom_call.1} parent=1 // pred_fallthru
      _
    // Predicated region
    $region26: #{tpu_custom_call.1} parent=1 // pred_check
      _
    $region27: #{tpu_custom_call.1} parent=1 // pred_check_branch
      %69 = sbr.rel (0) target = $region29
    $region28: #{tpu_custom_call.1} parent=1 // pred_region
      _
    $region29: #{tpu_custom_call.1} parent=1 // pred_fallthru
      _
    // Predicated region
    $region30: #{tpu_custom_call.1} parent=1 // pred_check
      _
    $region31: #{tpu_custom_call.1} parent=1 // pred_check_branch
      %71 = sbr.rel (0) target = $region33
    $region32: #{tpu_custom_call.1} parent=1 // pred_region
      %72 = dma.done [#allocation5], 256
    $region33: #{tpu_custom_call.1} parent=1 // pred_fallthru
      _
    // Predicated region
    $region34: #{tpu_custom_call.1} parent=1 // pred_check
      _
    $region35: #{tpu_custom_call.1} parent=1 // pred_check_branch
      %74 = sbr.rel (0) target = $region37
    $region36: #{tpu_custom_call.1} parent=1 // pred_region
      %75 = dma.done [#allocation8], 256
    $region37: #{tpu_custom_call.1} parent=1 // pred_fallthru
      _
    // Predicated region
    $region38: #{tpu_custom_call.1} parent=1 // pred_check
      _
    $region39: #{tpu_custom_call.1} parent=1 // pred_check_branch
      %77 = sbr.rel (0) target = $region41
    $region40: #{tpu_custom_call.1} parent=1 // pred_region
      %78 = dma.done [#allocation8], 1024
    $region41: #{tpu_custom_call.1} parent=1 // pred_fallthru
      _
    // Predicated region
    $region42: #{tpu_custom_call.1} parent=1 // pred_check
      _
    $region43: #{tpu_custom_call.1} parent=1 // pred_check_branch
      %80 = sbr.rel (0) target = $region45
    $region44: #{tpu_custom_call.1} parent=1 // pred_region
      %81 = dma.done [#allocation11], 1024
    $region45: #{tpu_custom_call.1} parent=1 // pred_fallthru
      _
    %v83 = vld [vmem:[#allocation4] sm:$0xff]
    %v84 = vld [vmem:[#allocation4 + $0x8] sm:$0xff]
    %v85 = vpack.c.bf16 %v84, %v83
    %v86 = vld [vmem:[#allocation7] sm:$0xf]
    %v87 = vld [vmem:[#allocation7 + $0x4] sm:$0xf]
    %v88 = vld [vmem:[#allocation7 + $0x8] sm:$0xf]
    %v89 = vld [vmem:[#allocation7 + $0xc] sm:$0xf]
    %v90 = vld [vmem:[%s2] sm:$0x1]
    %v92 = vlaneseq
    %v93 = vshrl.u32 %v92, 7
    %v94 = vsub.s32 0, %v93
    %v95 = vrot.slane %v90, %v94
    %v101 = vunpack.c.l.b16 %v86
    %v102 = vunpack.c.l.b16 %v87
    %v103 = vunpack.c.l.b16 %v88
    %v104 = vunpack.c.l.b16 %v89
    %v105 = vpack.c.b16 %v102, %v101
    %v106 = vpack.c.b16 %v104, %v103
    %vm109 = vcmask 261120
    %v111 = vsel %vm109, %v85, 0
    %113 = vmatprep.subr.bf16.mxu0 0
    %114 = vmatpush1.bf16.msra.mxu0 0
    %115 = vmatprep.subr.bf16.mxu0 0
    %116 = vmatpush1.bf16.msra.mxu0 0
    %117 = vmatprep.subr.bf16.mxu0 0
    %118 = vmatpush1.bf16.msra.mxu0 0
    %119 = vmatprep.subr.bf16.mxu0 0
    %120 = vmatpush1.bf16.msra.mxu0 0
    %121 = vmatprep.subr.bf16.mxu0 0
    %122 = vmatpush1.bf16.msra.mxu0 0
    %123 = vmatprep.subr.bf16.mxu0 0
    %124 = vmatpush1.bf16.msra.mxu0 0
    %125 = vmatprep.subr.bf16.mxu0 0
    %126 = vmatpush1.bf16.msra.mxu0 %v106
    %127 = vmatprep.subr.bf16.mxu0 0
    %128 = vmatpush1.bf16.msra.mxu0 %v105
    %129 = vmatprep.subr.bf16.mxu0 0
    %130 = vmatpush2.bf16.msra.mxu0 0
    %131 = vmatprep.subr.bf16.mxu0 0
    %132 = vmatpush2.bf16.msra.mxu0 0
    %133 = vmatprep.subr.bf16.mxu0 0
    %134 = vmatpush2.bf16.msra.mxu0 0
    %135 = vmatprep.subr.bf16.mxu0 0
    %136 = vmatpush2.bf16.msra.mxu0 0
    %137 = vmatprep.subr.bf16.mxu0 0
    %138 = vmatpush2.bf16.msra.mxu0 0
    %139 = vmatprep.subr.bf16.mxu0 0
    %140 = vmatpush2.bf16.msra.mxu0 0
    %141 = vmatprep.subr.bf16.mxu0 0
    %142 = vmatpush2.bf16.msra.mxu0 0
    %143 = vmatprep.subr.bf16.mxu0 0
    %144 = vmatpush2.bf16.msra.mxu0 0
    %145 = vmatprep.mubr.bf16.mxu0 0
    %146 = vmatmul.mubr.bf16.gmra.mxu0 %v111
    %v147 = vpop.f32.mrf.mxu0
    %v148 = vadd.f32 %v95, %v147
    %v149 = vpop.f32.mrf.mxu0
    %v150 = vpop.f32.mrf.mxu0
    %v151 = vadd.f32 %v95, %v150
    %v152 = vpop.f32.mrf.mxu0
    %153 = vdwg.mxu0
    %v154 = vmax.f32 %v148, 0.0
    %v155 = vmax.f32 %v151, 0.0
    %v156 = vpack.c.bf16 %v155, %v154
    %v158 = vunpack.c.l.b16 %v156
    %v159 = vunpack.c.h.b16 %v156
    %v160 = vpack.c.b16 %v158, %v158
    %v161 = vpack.c.b16 %v159, %v159
    %164 = vst [vmem:[#allocation2] sm:$0xf] %v160
    %165 = vst [vmem:[#allocation2 + $0x4] sm:$0xf] %v161
    %v166 = vld [vmem:[#allocation2] sm:$0xf]
    %v167 = vld [vmem:[#allocation2 + $0x4] sm:$0xf]
    %v168 = vld [vmem:[#allocation9] sm:$0xf]
    %v169 = vld [vmem:[#allocation9 + $0x4] sm:$0xf]
    %v170 = vld [vmem:[#allocation9 + $0x8] sm:$0xf]
    %v171 = vld [vmem:[#allocation9 + $0xc] sm:$0xf]
    %v172 = vld [vmem:[#allocation9 + $0x10] sm:$0xf]
    %v173 = vld [vmem:[#allocation9 + $0x14] sm:$0xf]
    %v174 = vld [vmem:[#allocation9 + $0x18] sm:$0xf]
    %v175 = vld [vmem:[#allocation9 + $0x1c] sm:$0xf]
    %v176 = vld [vmem:[#allocation9 + $0x20] sm:$0xf]
    %v177 = vld [vmem:[#allocation9 + $0x24] sm:$0xf]
    %v178 = vld [vmem:[#allocation9 + $0x28] sm:$0xf]
    %v179 = vld [vmem:[#allocation9 + $0x2c] sm:$0xf]
    %v180 = vld [vmem:[#allocation9 + $0x30] sm:$0xf]
    %v181 = vld [vmem:[#allocation9 + $0x34] sm:$0xf]
    %v182 = vld [vmem:[#allocation9 + $0x38] sm:$0xf]
    %v183 = vld [vmem:[#allocation9 + $0x3c] sm:$0xf]
    %v184 = vld [vmem:[%s4] sm:$0x1]
    %v186 = vlaneseq
    %v187 = vshrl.u32 %v186, 7
    %v188 = vsub.s32 0, %v187
    %v189 = vrot.slane %v184, %v188
    %v193 = vunpack.c.l.b16 %v166
    %v194 = vunpack.c.l.b16 %v167
    %v195 = vpack.c.b16 %v194, %v193
    %v213 = vunpack.c.l.b16 %v168
    %v214 = vunpack.c.l.b16 %v169
    %v215 = vunpack.c.l.b16 %v170
    %v216 = vunpack.c.l.b16 %v171
    %v217 = vunpack.c.l.b16 %v172
    %v218 = vunpack.c.l.b16 %v173
    %v219 = vunpack.c.l.b16 %v174
    %v220 = vunpack.c.l.b16 %v175
    %v221 = vunpack.c.l.b16 %v176
    %v222 = vunpack.c.l.b16 %v177
    %v223 = vunpack.c.l.b16 %v178
    %v224 = vunpack.c.l.b16 %v179
    %v225 = vunpack.c.l.b16 %v180
    %v226 = vunpack.c.l.b16 %v181
    %v227 = vunpack.c.l.b16 %v182
    %v228 = vunpack.c.l.b16 %v183
    %v229 = vpack.c.b16 %v214, %v213
    %v230 = vpack.c.b16 %v216, %v215
    %v231 = vpack.c.b16 %v218, %v217
    %v232 = vpack.c.b16 %v220, %v219
    %v233 = vpack.c.b16 %v222, %v221
    %v234 = vpack.c.b16 %v224, %v223
    %v235 = vpack.c.b16 %v226, %v225
    %v236 = vpack.c.b16 %v228, %v227
    %245 = vmatprep.subr.bf16.mxu0 0
    %246 = vmatpush1.bf16.msra.mxu0 %v236
    %247 = vmatprep.subr.bf16.mxu0 0
    %248 = vmatpush1.bf16.msra.mxu0 %v235
    %249 = vmatprep.subr.bf16.mxu0 0
    %250 = vmatpush1.bf16.msra.mxu0 %v234
    %251 = vmatprep.subr.bf16.mxu0 0
    %252 = vmatpush1.bf16.msra.mxu0 %v233
    %253 = vmatprep.subr.bf16.mxu0 0
    %254 = vmatpush1.bf16.msra.mxu0 %v232
    %255 = vmatprep.subr.bf16.mxu0 0
    %256 = vmatpush1.bf16.msra.mxu0 %v231
    %257 = vmatprep.subr.bf16.mxu0 0
    %258 = vmatpush1.bf16.msra.mxu0 %v230
    %259 = vmatprep.subr.bf16.mxu0 0
    %260 = vmatpush1.bf16.msra.mxu0 %v229
    %261 = vmatprep.subr.bf16.mxu0 0
    %262 = vmatpush2.bf16.msra.mxu0 0
    %263 = vmatprep.subr.bf16.mxu0 0
    %264 = vmatpush2.bf16.msra.mxu0 0
    %265 = vmatprep.subr.bf16.mxu0 0
    %266 = vmatpush2.bf16.msra.mxu0 0
    %267 = vmatprep.subr.bf16.mxu0 0
    %268 = vmatpush2.bf16.msra.mxu0 0
    %269 = vmatprep.subr.bf16.mxu0 0
    %270 = vmatpush2.bf16.msra.mxu0 0
    %271 = vmatprep.subr.bf16.mxu0 0
    %272 = vmatpush2.bf16.msra.mxu0 0
    %273 = vmatprep.subr.bf16.mxu0 0
    %274 = vmatpush2.bf16.msra.mxu0 0
    %275 = vmatprep.subr.bf16.mxu0 0
    %276 = vmatpush2.bf16.msra.mxu0 0
    %277 = vmatprep.mubr.bf16.mxu0 0
    %278 = vmatmul.mubr.bf16.gmra.mxu0 %v195
    %v279 = vpop.f32.mrf.mxu0
    %v280 = vadd.f32 %v189, %v279
    %v281 = vpop.f32.mrf.mxu0
    %v282 = vpop.f32.mrf.mxu0
    %v283 = vadd.f32 %v189, %v282
    %v284 = vpop.f32.mrf.mxu0
    %285 = vdwg.mxu0
    %v286 = vmax.f32 %v280, 0.0
    %v287 = vmax.f32 %v283, 0.0
    %v288 = vpack.c.bf16 %v287, %v286
    %v290 = vunpack.c.l.b16 %v288
    %v291 = vunpack.c.h.b16 %v288
    %v292 = vpack.c.b16 %v290, %v290
    %v293 = vpack.c.b16 %v291, %v291
    %296 = vst [vmem:[#allocation3] sm:$0xf] %v292
    %297 = vst [vmem:[#allocation3 + $0x4] sm:$0xf] %v293
    %v298 = vld [vmem:[#allocation3] sm:$0xf]
    %v299 = vld [vmem:[#allocation3 + $0x4] sm:$0xf]
    %v300 = vld [vmem:[#allocation10] sm:$0xf]
    %v301 = vld [vmem:[#allocation10 + $0x4] sm:$0xf]
    %v302 = vld [vmem:[#allocation10 + $0x8] sm:$0xf]
    %v303 = vld [vmem:[#allocation10 + $0xc] sm:$0xf]
    %v304 = vld [vmem:[#allocation10 + $0x10] sm:$0xf]
    %v305 = vld [vmem:[#allocation10 + $0x14] sm:$0xf]
    %v306 = vld [vmem:[#allocation10 + $0x18] sm:$0xf]
    %v307 = vld [vmem:[#allocation10 + $0x1c] sm:$0xf]
    %v308 = vld [vmem:[#allocation10 + $0x20] sm:$0xf]
    %v309 = vld [vmem:[#allocation10 + $0x24] sm:$0xf]
    %v310 = vld [vmem:[#allocation10 + $0x28] sm:$0xf]
    %v311 = vld [vmem:[#allocation10 + $0x2c] sm:$0xf]
    %v312 = vld [vmem:[#allocation10 + $0x30] sm:$0xf]
    %v313 = vld [vmem:[#allocation10 + $0x34] sm:$0xf]
    %v314 = vld [vmem:[#allocation10 + $0x38] sm:$0xf]
    %v315 = vld [vmem:[#allocation10 + $0x3c] sm:$0xf]
    %v316 = vld [vmem:[%s6] sm:$0x1]
    %v318 = vlaneseq
    %v319 = vshrl.u32 %v318, 7
    %v320 = vsub.s32 0, %v319
    %v321 = vrot.slane %v316, %v320
    %v325 = vunpack.c.l.b16 %v298
    %v326 = vunpack.c.l.b16 %v299
    %v327 = vpack.c.b16 %v326, %v325
    %v345 = vunpack.c.l.b16 %v300
    %v346 = vunpack.c.l.b16 %v301
    %v347 = vunpack.c.l.b16 %v302
    %v348 = vunpack.c.l.b16 %v303
    %v349 = vunpack.c.l.b16 %v304
    %v350 = vunpack.c.l.b16 %v305
    %v351 = vunpack.c.l.b16 %v306
    %v352 = vunpack.c.l.b16 %v307
    %v353 = vunpack.c.l.b16 %v308
    %v354 = vunpack.c.l.b16 %v309
    %v355 = vunpack.c.l.b16 %v310
    %v356 = vunpack.c.l.b16 %v311
    %v357 = vunpack.c.l.b16 %v312
    %v358 = vunpack.c.l.b16 %v313
    %v359 = vunpack.c.l.b16 %v314
    %v360 = vunpack.c.l.b16 %v315
    %v361 = vpack.c.b16 %v346, %v345
    %v362 = vpack.c.b16 %v348, %v347
    %v363 = vpack.c.b16 %v350, %v349
    %v364 = vpack.c.b16 %v352, %v351
    %v365 = vpack.c.b16 %v354, %v353
    %v366 = vpack.c.b16 %v356, %v355
    %v367 = vpack.c.b16 %v358, %v357
    %v368 = vpack.c.b16 %v360, %v359
    %377 = vmatprep.subr.bf16.mxu0 0
    %378 = vmatpush1.bf16.msra.mxu0 %v368
    %379 = vmatprep.subr.bf16.mxu0 0
    %380 = vmatpush1.bf16.msra.mxu0 %v367
    %381 = vmatprep.subr.bf16.mxu0 0
    %382 = vmatpush1.bf16.msra.mxu0 %v366
    %383 = vmatprep.subr.bf16.mxu0 0
    %384 = vmatpush1.bf16.msra.mxu0 %v365
    %385 = vmatprep.subr.bf16.mxu0 0
    %386 = vmatpush1.bf16.msra.mxu0 %v364
    %387 = vmatprep.subr.bf16.mxu0 0
    %388 = vmatpush1.bf16.msra.mxu0 %v363
    %389 = vmatprep.subr.bf16.mxu0 0
    %390 = vmatpush1.bf16.msra.mxu0 %v362
    %391 = vmatprep.subr.bf16.mxu0 0
    %392 = vmatpush1.bf16.msra.mxu0 %v361
    %393 = vmatprep.subr.bf16.mxu0 0
    %394 = vmatpush2.bf16.msra.mxu0 0
    %395 = vmatprep.subr.bf16.mxu0 0
    %396 = vmatpush2.bf16.msra.mxu0 0
    %397 = vmatprep.subr.bf16.mxu0 0
    %398 = vmatpush2.bf16.msra.mxu0 0
    %399 = vmatprep.subr.bf16.mxu0 0
    %400 = vmatpush2.bf16.msra.mxu0 0
    %401 = vmatprep.subr.bf16.mxu0 0
    %402 = vmatpush2.bf16.msra.mxu0 0
    %403 = vmatprep.subr.bf16.mxu0 0
    %404 = vmatpush2.bf16.msra.mxu0 0
    %405 = vmatprep.subr.bf16.mxu0 0
    %406 = vmatpush2.bf16.msra.mxu0 0
    %407 = vmatprep.subr.bf16.mxu0 0
    %408 = vmatpush2.bf16.msra.mxu0 0
    %409 = vmatprep.mubr.bf16.mxu0 0
    %410 = vmatmul.mubr.bf16.gmra.mxu0 %v327
    %v411 = vpop.f32.mrf.mxu0
    %v412 = vadd.f32 %v321, %v411
    %v413 = vpop.f32.mrf.mxu0
    %v414 = vpop.f32.mrf.mxu0
    %v415 = vadd.f32 %v321, %v414
    %v416 = vpop.f32.mrf.mxu0
    %417 = vdwg.mxu0
    %418 = vst [vmem:[#allocation12] sm:$0xff] %v412
    %419 = vst [vmem:[#allocation12 + $0x8] sm:$0xff] %v415
    // Predicated region
    $region46: #{tpu_custom_call.1} parent=1 // pred_check
      _
    $region47: #{tpu_custom_call.1} parent=1 // pred_check_branch
      %421 = sbr.rel (0) target = $region49
    $region48: #{tpu_custom_call.1} parent=1 // pred_region
      %s423 = ssub.s32 256, 256
      %424 = vsyncadd [#allocation6], %s423
      %s425 = sshll.u32 [#allocation12], 4
      %s426 = int_to_ptr.vmem [resolvable:$true] %s425
      %431 = dma.vmem_to_hbm [thread:$0]  %s426, 256, %s7, [#allocation6], 128, 128, 8
    $region49: #{tpu_custom_call.1} parent=1 // pred_fallthru
      _
    // Predicated region
    $region50: #{tpu_custom_call.1} parent=1 // pred_check
      _
    $region51: #{tpu_custom_call.1} parent=1 // pred_check_branch
      %433 = sbr.rel (0) target = $region53
    $region52: #{tpu_custom_call.1} parent=1 // pred_region
      %434 = dma.done [#allocation6], 256
    $region53: #{tpu_custom_call.1} parent=1 // pred_fallthru
      _
    %435 = vsyncpa [#allocation5], 1
    %436 = vsyncpa [#allocation8], 1
    %437 = vsyncpa [#allocation11], 1
    %438 = vsyncpa [#allocation6], 1

</llo_original>
